<compile_context>
chip_gen: v7x
topology: tpu7x:2x2x1
jax: 0.10.0
libtpu: 0.0.40
codegen_flags: <defaults>
</compile_context>

<pallas_src>
import functools

import jax
import jax.numpy as jnp
from jax import lax
from jax.experimental import pallas as pl
from jax.experimental.pallas import tpu as pltpu


# ----------------------------------------------------------------------------
# Kernel 1: hoisted input projection + serial LSTM recurrence (fused gates).
# ----------------------------------------------------------------------------
def lstm_recurrence_kernel(x_ref, w_x_ref, w_h_ref, b_ref, h0_ref, c0_ref,
                           hseq_ref, h_out_ref, c_out_ref,
                           gates_ref, *, seq_len, batch_pad, hidden):
    # Prologue: ONE fused (S*Bp, H) x (H, 4H) bf16 matmul, f32 accumulate,
    # both LSTM biases folded in.  Gate column order: [i | f | g | o].
    gates_ref[...] = (
        jnp.dot(x_ref[...], w_x_ref[...], preferred_element_type=jnp.float32)
        + b_ref[...])

    w_h = w_h_ref[...]                                   # (H, 4H) bf16, loop-invariant

    # TODO(synk): on hardware where the fused (H, 4H) tile fits one MXU staging
    # tile, keep W_hh stationary via pltpu.matmul_push_rhs / matmul_acc_lhs /
    # matmul_pop to avoid re-loading the weights into the systolic array each
    # serial step.
    def step(t, carry):
        h, c = carry                                     # (Bp, H) f32
        r = pl.multiple_of(t * batch_pad, batch_pad)
        rows = pl.ds(r, batch_pad)
        # ONE (Bp, H) x (H, 4H) matmul per step on the serial critical path.
        g = gates_ref[rows, :] + jnp.dot(
            h.astype(jnp.bfloat16), w_h, preferred_element_type=jnp.float32)
        i_g = jax.nn.sigmoid(g[:, 0 * hidden:1 * hidden])
        f_g = jax.nn.sigmoid(g[:, 1 * hidden:2 * hidden])
        g_g = jnp.tanh(g[:, 2 * hidden:3 * hidden])
        o_g = jax.nn.sigmoid(g[:, 3 * hidden:4 * hidden])
        c_new = f_g * c + i_g * g_g                      # f32 cell state
        h_new = o_g * jnp.tanh(c_new)
        hseq_ref[rows, :] = h_new                        # aligned 8-sublane f32 store
        return (h_new, c_new)

    # Re-swept after fusing the gate matmuls: deeper unroll gives the scheduler
    # slack to overlap the single fused matmul with the VPU/EUP gate math.
    unroll = True if seq_len <= 16 else 8
    h_n, c_n = lax.fori_loop(0, seq_len, step, (h0_ref[...], c0_ref[...]),
                             unroll=unroll)
    h_out_ref[...] = h_n
    c_out_ref[...] = c_n

    # TODO(synk): for B_pad >= 16 on v7x, split the recurrence across batch over
    # the two TensorCores (leading "parallel" grid axis of size 2, each core
    # carrying its own (Bp/2, H) h/c and writing its half of hseq).


# ----------------------------------------------------------------------------
# Kernel 2: gridded output projection + log-softmax (row-tile "parallel").
# ----------------------------------------------------------------------------
def output_logsoftmax_kernel(hseq_ref, w_out_ref, b_out_ref, out_ref):
    hs = hseq_ref[...].astype(jnp.bfloat16)              # (row_tile, H) bf16 operand
    logits = jnp.dot(hs, w_out_ref[...],
                     preferred_element_type=jnp.float32) + b_out_ref[...]
    m = jnp.max(logits, axis=-1, keepdims=True)
    shifted = logits - m
    lse = jnp.log(jnp.sum(jnp.exp(shifted), axis=-1, keepdims=True))
    out_ref[...] = shifted - lse                          # lane-dense (row_tile, V_pad)


def _vmem_limit_bytes():
    """~75% of physical VMEM, capped: looser on v5e/v6e (128 MiB), tight on v7x (64 MiB)."""
    try:
        cap = pltpu.get_tpu_info().vmem_capacity_bytes
    except Exception:
        cap = 64 * 1024 * 1024
    return min(int(cap * 3 // 4), 100 * 1024 * 1024)


def decoder_forward(tokens, hidden0, cell0, params):
    """tokens: (B, S) int32; hidden0/cell0: (1, B, H) float32."""
    emb = params["embedding"]            # (V, H)
    w_ih = params["w_ih"]                # (4H, H), gate order i,f,g,o
    w_hh = params["w_hh"]                # (4H, H)
    b_out = params["b_out"]              # (V,)

    B, S = tokens.shape
    V, H = emb.shape
    B_pad = max(8, ((B + 7) // 8) * 8)          # sublane padding
    V_pad = max(128, ((V + 127) // 128) * 128)  # lane-dense output
    rows = S * B_pad

    # Embedding lookup + ReLU in the wrapper (gather), seq-major, batch padded,
    # bf16 matmul operand.
    x = jnp.maximum(jnp.take(emb, tokens, axis=0), 0.0)      # (B, S, H)
    x = jnp.transpose(x, (1, 0, 2))                          # (S, B, H)
    x = jnp.pad(x, ((0, 0), (0, B_pad - B), (0, 0)))
    x = x.reshape(rows, H).astype(jnp.bfloat16)

    # Fused gate weights: (H, 4H) slabs, columns ordered [i | f | g | o]
    # (PyTorch's row order transposed).  Both biases folded into one f32 row.
    w_x = w_ih.T.astype(jnp.bfloat16)                        # (H, 4H)
    w_h = w_hh.T.astype(jnp.bfloat16)                        # (H, 4H)
    b4 = (params["b_ih"] + params["b_hh"]).reshape(1, 4 * H).astype(jnp.float32)

    # Output projection padded to a lane-dense V_pad; padded columns get a
    # -1e30 f32 bias so they never influence max / sum-exp of the log-softmax.
    w_out_t = jnp.zeros((H, V_pad), jnp.bfloat16).at[:, :V].set(
        params["w_out"].T.astype(jnp.bfloat16))
    b_out_p = jnp.full((1, V_pad), -1e30, jnp.float32).at[:, :V].set(b_out)

    h0 = jnp.pad(hidden0[0].astype(jnp.float32), ((0, B_pad - B), (0, 0)))
    c0 = jnp.pad(cell0[0].astype(jnp.float32), ((0, B_pad - B), (0, 0)))

    vmem = pl.BlockSpec(memory_space=pltpu.MemorySpace.VMEM)
    vmem_limit = _vmem_limit_bytes()

    # ---------------- Call 1: recurrence (serial, un-gridded) ----------------
    rec_kernel = functools.partial(lstm_recurrence_kernel, seq_len=S,
                                   batch_pad=B_pad, hidden=H)
    rec_flops = 2 * rows * H * (4 * H) + 2 * rows * H * (4 * H)
    rec_trans = rows * 5 * H
    rec_bytes = (2 * rows * H + 2 * 2 * H * 4 * H + 4 * 4 * H
                 + 4 * 2 * B_pad * H            # h0, c0 in
                 + 4 * rows * H                 # hseq out
                 + 4 * 2 * B_pad * H)           # h_n, c_n out

    hseq, h_n, c_n = pl.pallas_call(
        rec_kernel,
        out_shape=(jax.ShapeDtypeStruct((rows, H), jnp.float32),
                   jax.ShapeDtypeStruct((B_pad, H), jnp.float32),
                   jax.ShapeDtypeStruct((B_pad, H), jnp.float32)),
        in_specs=[vmem] * 6,
        out_specs=(vmem, vmem, vmem),
        scratch_shapes=[pltpu.VMEM((rows, 4 * H), jnp.float32)],
        compiler_params=pltpu.CompilerParams(vmem_limit_bytes=vmem_limit),
        cost_estimate=pl.CostEstimate(flops=rec_flops,
                                      transcendentals=rec_trans,
                                      bytes_accessed=rec_bytes),
    )(x, w_x, w_h, b4, h0, c0)

    # -------- Call 2: output projection + log-softmax, row-tiled grid --------
    # Row tile: multiple of B_pad, divides rows, targets ~512 rows per tile.
    steps_per_tile = max(1, min(S, 512 // B_pad))
    while S % steps_per_tile:
        steps_per_tile -= 1
    row_tile = steps_per_tile * B_pad
    n_row_tiles = rows // row_tile

    out_flops = 2 * rows * H * V_pad
    out_trans = rows * (V_pad + 1)
    out_bytes = (4 * rows * H + 2 * H * V_pad + 4 * V_pad + 4 * rows * V_pad)

    # TODO(synk): for realistic vocab sizes, keep w_out in HBM (memory_space=
    # pl.ANY or a vocab-tiled BlockSpec) and add a vocab-tile "arbitrary" grid
    # axis with an online (two-pass) log-softmax so neither the weights nor the
    # (rows, V_pad) output ever need to be VMEM-resident at once.
    out = pl.pallas_call(
        output_logsoftmax_kernel,
        out_shape=jax.ShapeDtypeStruct((rows, V_pad), jnp.float32),
        grid=(n_row_tiles,),
        in_specs=[pl.BlockSpec((row_tile, H), lambda i: (i, 0)),
                  pl.BlockSpec((H, V_pad), lambda i: (0, 0)),
                  pl.BlockSpec((1, V_pad), lambda i: (0, 0))],
        out_specs=pl.BlockSpec((row_tile, V_pad), lambda i: (i, 0)),
        compiler_params=pltpu.CompilerParams(
            dimension_semantics=("parallel",),
            vmem_limit_bytes=vmem_limit),
        cost_estimate=pl.CostEstimate(flops=out_flops,
                                      transcendentals=out_trans,
                                      bytes_accessed=out_bytes),
    )(hseq, w_out_t, b_out_p)

    logp = out.reshape(S, B_pad, V_pad)[:, :B, :V]
    logp = jnp.transpose(logp, (1, 0, 2))                    # (B, S, V) batch_first
    return logp, h_n[:B][None], c_n[:B][None]                # hidden/cell: (1, B, H)


def init_params(key, input_size, hidden_size):
    """Deterministic synthetic params matching nn.Embedding / nn.LSTM / nn.Linear shapes."""
    k = 1.0 / float(hidden_size) ** 0.5
    ks = jax.random.split(key, 7)

    def u(kk, shape):
        return jax.random.uniform(kk, shape, jnp.float32, minval=-k, maxval=k)

    emb = jax.random.normal(ks[0], (input_size, hidden_size), jnp.float32)
    emb = emb.at[2].set(0.0)   # padding_idx=2 -> zero row

    return {
        "embedding": emb,
        "w_ih": u(ks[1], (4 * hidden_size, hidden_size)),
        "w_hh": u(ks[2], (4 * hidden_size, hidden_size)),
        "b_ih": u(ks[3], (4 * hidden_size,)),
        "b_hh": u(ks[4], (4 * hidden_size,)),
        "w_out": u(ks[5], (input_size, hidden_size)),
        "b_out": u(ks[6], (input_size,)),
    }


def _reference_forward(tokens, hidden0, cell0, params):
    """Pure-JAX f32 reference of the PyTorch forward, for validation."""
    emb = params["embedding"]
    H = emb.shape[1]
    x = jnp.maximum(emb[tokens], 0.0)                 # (B, S, H)
    h, c = hidden0[0], cell0[0]
    outs = []
    for t in range(tokens.shape[1]):
        g = (x[:, t] @ params["w_ih"].T + params["b_ih"]
             + h @ params["w_hh"].T + params["b_hh"])
        i_g = jax.nn.sigmoid(g[:, :H]); f_g = jax.nn.sigmoid(g[:, H:2 * H])
        g_g = jnp.tanh(g[:, 2 * H:3 * H]); o_g = jax.nn.sigmoid(g[:, 3 * H:])
        c = f_g * c + i_g * g_g
        h = o_g * jnp.tanh(c)
        outs.append(h)
    hs = jnp.stack(outs, axis=1)                      # (B, S, H)
    logits = hs @ params["w_out"].T + params["b_out"]
    return jax.nn.log_softmax(logits, axis=2), h[None], c[None]


if __name__ == "__main__":
    INPUT_SIZE = 16   # vocab
    HIDDEN = 32
    B, S = 2, 8

    key = jax.random.PRNGKey(0)
    k_tok, k_par = jax.random.split(key)

    params = init_params(k_par, INPUT_SIZE, HIDDEN)
    tokens = jax.random.randint(k_tok, (B, S), 0, INPUT_SIZE, dtype=jnp.int32)
    hidden0 = jnp.zeros((1, B, HIDDEN), jnp.float32)   # Decoder.inithidden
    cell0 = jnp.zeros((1, B, HIDDEN), jnp.float32)     # Decoder.initcell

    logp, h_n, c_n = decoder_forward(tokens, hidden0, cell0, params)
    jax.block_until_ready((logp, h_n, c_n))

    ref_logp, ref_h, ref_c = _reference_forward(tokens, hidden0, cell0, params)
    assert logp.shape == (B, S, INPUT_SIZE)
    assert h_n.shape == (1, B, HIDDEN) and c_n.shape == (1, B, HIDDEN)
    # Matmul operands are bf16 (accumulate f32) per the perf review -> relaxed
    # tolerance vs. the pure-f32 reference.
    assert jnp.allclose(logp, ref_logp, atol=5e-2, rtol=5e-2)
    assert jnp.allclose(h_n, ref_h, atol=5e-2, rtol=5e-2)
    assert jnp.allclose(c_n, ref_c, atol=5e-2, rtol=5e-2)

    print("KERNEL_OK")
</pallas_src>

<mosaic_0001>
module attributes {stable_mosaic.version = 11 : i64} {
  func.func @lstm_recurrence_kernel(%arg0: memref<64x32xbf16, #tpu.memory_space<vmem>>, %arg1: memref<32x128xbf16, #tpu.memory_space<vmem>>, %arg2: memref<32x128xbf16, #tpu.memory_space<vmem>>, %arg3: memref<1x128xf32, #tpu.memory_space<vmem>>, %arg4: memref<8x32xf32, #tpu.memory_space<vmem>>, %arg5: memref<8x32xf32, #tpu.memory_space<vmem>>, %arg6: memref<64x32xf32, #tpu.memory_space<vmem>>, %arg7: memref<8x32xf32, #tpu.memory_space<vmem>>, %arg8: memref<8x32xf32, #tpu.memory_space<vmem>>, %arg9: memref<64x128xf32, #tpu.memory_space<vmem>>) attributes {dimension_semantics = [], scalar_prefetch = 0 : i64, scratch_operands = 1 : i64, tpu.core_type = #tpu.core_type<tc>} {
    %c0 = arith.constant 0 : index
    %c0_0 = arith.constant 0 : index
    %0 = vector.load %arg0[%c0, %c0_0] : memref<64x32xbf16, #tpu.memory_space<vmem>>, vector<64x32xbf16>
    %c0_1 = arith.constant 0 : index
    %c0_2 = arith.constant 0 : index
    %1 = vector.load %arg1[%c0_1, %c0_2] : memref<32x128xbf16, #tpu.memory_space<vmem>>, vector<32x128xbf16>
    %cst = arith.constant dense<0.000000e+00> : vector<64x128xf32>
    %2 = tpu.matmul %0, %1, %cst {dimension_numbers = #tpu.dot_dimension_numbers<[1], [0], [0], [1], [0, 0, 1, 1], [], []>} : vector<64x32xbf16>, vector<32x128xbf16>, vector<64x128xf32> -> vector<64x128xf32>
    %c0_3 = arith.constant 0 : index
    %c0_4 = arith.constant 0 : index
    %3 = vector.load %arg3[%c0_3, %c0_4] : memref<1x128xf32, #tpu.memory_space<vmem>>, vector<1x128xf32>
    %4 = vector.broadcast %3 : vector<1x128xf32> to vector<64x128xf32>
    %5 = arith.addf %2, %4 : vector<64x128xf32>
    %c0_5 = arith.constant 0 : index
    %c0_6 = arith.constant 0 : index
    %6 = vector.load %arg9[%c0_5, %c0_6] : memref<64x128xf32, #tpu.memory_space<vmem>>, vector<64x128xf32>
    tpu.vector_store %arg9[%c0_5, %c0_6], %5 {strides = array<i32>} : memref<64x128xf32, #tpu.memory_space<vmem>>, vector<64x128xf32>,
    %c0_7 = arith.constant 0 : index
    %c0_8 = arith.constant 0 : index
    %7 = vector.load %arg2[%c0_7, %c0_8] : memref<32x128xbf16, #tpu.memory_space<vmem>>, vector<32x128xbf16>
    %c0_9 = arith.constant 0 : index
    %c0_10 = arith.constant 0 : index
    %8 = vector.load %arg4[%c0_9, %c0_10] : memref<8x32xf32, #tpu.memory_space<vmem>>, vector<8x32xf32>
    %c0_11 = arith.constant 0 : index
    %c0_12 = arith.constant 0 : index
    %9 = vector.load %arg5[%c0_11, %c0_12] : memref<8x32xf32, #tpu.memory_space<vmem>>, vector<8x32xf32>
    %c0_i32 = arith.constant 0 : i32
    %c8_i32 = arith.constant 8 : i32
    %10 = arith.muli %c0_i32, %c8_i32 : i32
    %11 = tpu.assume_multiple %10, 8 : i32
    %12 = arith.index_cast %11 : i32 to index
    %c0_13 = arith.constant 0 : index
    %13 = vector.load %arg9[%12, %c0_13] : memref<64x128xf32, #tpu.memory_space<vmem>>, vector<8x128xf32>
    %14 = arith.truncf %8 : vector<8x32xf32> to vector<8x32xbf16>
    %cst_14 = arith.constant dense<0.000000e+00> : vector<8x128xf32>
    %15 = tpu.matmul %14, %7, %cst_14 {dimension_numbers = #tpu.dot_dimension_numbers<[1], [0], [0], [1], [0, 0, 1, 1], [], []>} : vector<8x32xbf16>, vector<32x128xbf16>, vector<8x128xf32> -> vector<8x128xf32>
    %16 = arith.addf %13, %15 : vector<8x128xf32>
    %17 = vector.extract_strided_slice %16 {offsets = [0, 0], sizes = [8, 32], strides = [1, 1]} : vector<8x128xf32> to vector<8x32xf32>
    %18 = arith.negf %17 : vector<8x32xf32>
    %19 = math.exp %18 : vector<8x32xf32>
    %cst_15 = arith.constant 1.000000e+00 : f32
    %20 = vector.broadcast %cst_15 : f32 to vector<8x32xf32>
    %21 = arith.addf %20, %19 : vector<8x32xf32>
    %22 = arith.divf %20, %21 : vector<8x32xf32>
    %23 = vector.extract_strided_slice %16 {offsets = [0, 32], sizes = [8, 32], strides = [1, 1]} : vector<8x128xf32> to vector<8x32xf32>
    %24 = arith.negf %23 : vector<8x32xf32>
    %25 = math.exp %24 : vector<8x32xf32>
    %cst_16 = arith.constant 1.000000e+00 : f32
    %26 = vector.broadcast %cst_16 : f32 to vector<8x32xf32>
    %27 = arith.addf %26, %25 : vector<8x32xf32>
    %28 = arith.divf %26, %27 : vector<8x32xf32>
    %29 = vector.extract_strided_slice %16 {offsets = [0, 64], sizes = [8, 32], strides = [1, 1]} : vector<8x128xf32> to vector<8x32xf32>
    %30 = math.tanh %29 : vector<8x32xf32>
    %31 = vector.extract_strided_slice %16 {offsets = [0, 96], sizes = [8, 32], strides = [1, 1]} : vector<8x128xf32> to vector<8x32xf32>
    %32 = arith.negf %31 : vector<8x32xf32>
    %33 = math.exp %32 : vector<8x32xf32>
    %cst_17 = arith.constant 1.000000e+00 : f32
    %34 = vector.broadcast %cst_17 : f32 to vector<8x32xf32>
    %35 = arith.addf %34, %33 : vector<8x32xf32>
    %36 = arith.divf %34, %35 : vector<8x32xf32>
    %37 = arith.mulf %28, %9 : vector<8x32xf32>
    %38 = arith.mulf %22, %30 : vector<8x32xf32>
    %39 = arith.addf %37, %38 : vector<8x32xf32>
    %40 = math.tanh %39 : vector<8x32xf32>
    %41 = arith.mulf %36, %40 : vector<8x32xf32>
    %42 = arith.index_cast %11 : i32 to index
    %c0_18 = arith.constant 0 : index
    %43 = vector.load %arg6[%42, %c0_18] : memref<64x32xf32, #tpu.memory_space<vmem>>, vector<8x32xf32>
    tpu.vector_store %arg6[%42, %c0_18], %41 {strides = array<i32>} : memref<64x32xf32, #tpu.memory_space<vmem>>, vector<8x32xf32>,
    %c1_i32 = arith.constant 1 : i32
    %c8_i32_19 = arith.constant 8 : i32
    %44 = arith.muli %c1_i32, %c8_i32_19 : i32
    %45 = tpu.assume_multiple %44, 8 : i32
    %46 = arith.index_cast %45 : i32 to index
    %c0_20 = arith.constant 0 : index
    %47 = vector.load %arg9[%46, %c0_20] : memref<64x128xf32, #tpu.memory_space<vmem>>, vector<8x128xf32>
    %48 = arith.truncf %41 : vector<8x32xf32> to vector<8x32xbf16>
    %cst_21 = arith.constant dense<0.000000e+00> : vector<8x128xf32>
    %49 = tpu.matmul %48, %7, %cst_21 {dimension_numbers = #tpu.dot_dimension_numbers<[1], [0], [0], [1], [0, 0, 1, 1], [], []>} : vector<8x32xbf16>, vector<32x128xbf16>, vector<8x128xf32> -> vector<8x128xf32>
    %50 = arith.addf %47, %49 : vector<8x128xf32>
    %51 = vector.extract_strided_slice %50 {offsets = [0, 0], sizes = [8, 32], strides = [1, 1]} : vector<8x128xf32> to vector<8x32xf32>
    %52 = arith.negf %51 : vector<8x32xf32>
    %53 = math.exp %52 : vector<8x32xf32>
    %cst_22 = arith.constant 1.000000e+00 : f32
    %54 = vector.broadcast %cst_22 : f32 to vector<8x32xf32>
    %55 = arith.addf %54, %53 : vector<8x32xf32>
    %56 = arith.divf %54, %55 : vector<8x32xf32>
    %57 = vector.extract_strided_slice %50 {offsets = [0, 32], sizes = [8, 32], strides = [1, 1]} : vector<8x128xf32> to vector<8x32xf32>
    %58 = arith.negf %57 : vector<8x32xf32>
    %59 = math.exp %58 : vector<8x32xf32>
    %cst_23 = arith.constant 1.000000e+00 : f32
    %60 = vector.broadcast %cst_23 : f32 to vector<8x32xf32>
    %61 = arith.addf %60, %59 : vector<8x32xf32>
    %62 = arith.divf %60, %61 : vector<8x32xf32>
    %63 = vector.extract_strided_slice %50 {offsets = [0, 64], sizes = [8, 32], strides = [1, 1]} : vector<8x128xf32> to vector<8x32xf32>
    %64 = math.tanh %63 : vector<8x32xf32>
    %65 = vector.extract_strided_slice %50 {offsets = [0, 96], sizes = [8, 32], strides = [1, 1]} : vector<8x128xf32> to vector<8x32xf32>
    %66 = arith.negf %65 : vector<8x32xf32>
    %67 = math.exp %66 : vector<8x32xf32>
    %cst_24 = arith.constant 1.000000e+00 : f32
    %68 = vector.broadcast %cst_24 : f32 to vector<8x32xf32>
    %69 = arith.addf %68, %67 : vector<8x32xf32>
    %70 = arith.divf %68, %69 : vector<8x32xf32>
    %71 = arith.mulf %62, %39 : vector<8x32xf32>
    %72 = arith.mulf %56, %64 : vector<8x32xf32>
    %73 = arith.addf %71, %72 : vector<8x32xf32>
    %74 = math.tanh %73 : vector<8x32xf32>
    %75 = arith.mulf %70, %74 : vector<8x32xf32>
    %76 = arith.index_cast %45 : i32 to index
    %c0_25 = arith.constant 0 : index
    %77 = vector.load %arg6[%76, %c0_25] : memref<64x32xf32, #tpu.memory_space<vmem>>, vector<8x32xf32>
    tpu.vector_store %arg6[%76, %c0_25], %75 {strides = array<i32>} : memref<64x32xf32, #tpu.memory_space<vmem>>, vector<8x32xf32>,
    %c2_i32 = arith.constant 2 : i32
    %c8_i32_26 = arith.constant 8 : i32
    %78 = arith.muli %c2_i32, %c8_i32_26 : i32
    %79 = tpu.assume_multiple %78, 8 : i32
    %80 = arith.index_cast %79 : i32 to index
    %c0_27 = arith.constant 0 : index
    %81 = vector.load %arg9[%80, %c0_27] : memref<64x128xf32, #tpu.memory_space<vmem>>, vector<8x128xf32>
    %82 = arith.truncf %75 : vector<8x32xf32> to vector<8x32xbf16>
    %cst_28 = arith.constant dense<0.000000e+00> : vector<8x128xf32>
    %83 = tpu.matmul %82, %7, %cst_28 {dimension_numbers = #tpu.dot_dimension_numbers<[1], [0], [0], [1], [0, 0, 1, 1], [], []>} : vector<8x32xbf16>, vector<32x128xbf16>, vector<8x128xf32> -> vector<8x128xf32>
    %84 = arith.addf %81, %83 : vector<8x128xf32>
    %85 = vector.extract_strided_slice %84 {offsets = [0, 0], sizes = [8, 32], strides = [1, 1]} : vector<8x128xf32> to vector<8x32xf32>
    %86 = arith.negf %85 : vector<8x32xf32>
    %87 = math.exp %86 : vector<8x32xf32>
    %cst_29 = arith.constant 1.000000e+00 : f32
    %88 = vector.broadcast %cst_29 : f32 to vector<8x32xf32>
    %89 = arith.addf %88, %87 : vector<8x32xf32>
    %90 = arith.divf %88, %89 : vector<8x32xf32>
    %91 = vector.extract_strided_slice %84 {offsets = [0, 32], sizes = [8, 32], strides = [1, 1]} : vector<8x128xf32> to vector<8x32xf32>
    %92 = arith.negf %91 : vector<8x32xf32>
    %93 = math.exp %92 : vector<8x32xf32>
    %cst_30 = arith.constant 1.000000e+00 : f32
    %94 = vector.broadcast %cst_30 : f32 to vector<8x32xf32>
    %95 = arith.addf %94, %93 : vector<8x32xf32>
    %96 = arith.divf %94, %95 : vector<8x32xf32>
    %97 = vector.extract_strided_slice %84 {offsets = [0, 64], sizes = [8, 32], strides = [1, 1]} : vector<8x128xf32> to vector<8x32xf32>
    %98 = math.tanh %97 : vector<8x32xf32>
    %99 = vector.extract_strided_slice %84 {offsets = [0, 96], sizes = [8, 32], strides = [1, 1]} : vector<8x128xf32> to vector<8x32xf32>
    %100 = arith.negf %99 : vector<8x32xf32>
    %101 = math.exp %100 : vector<8x32xf32>
    %cst_31 = arith.constant 1.000000e+00 : f32
    %102 = vector.broadcast %cst_31 : f32 to vector<8x32xf32>
    %103 = arith.addf %102, %101 : vector<8x32xf32>
    %104 = arith.divf %102, %103 : vector<8x32xf32>
    %105 = arith.mulf %96, %73 : vector<8x32xf32>
    %106 = arith.mulf %90, %98 : vector<8x32xf32>
    %107 = arith.addf %105, %106 : vector<8x32xf32>
    %108 = math.tanh %107 : vector<8x32xf32>
    %109 = arith.mulf %104, %108 : vector<8x32xf32>
    %110 = arith.index_cast %79 : i32 to index
    %c0_32 = arith.constant 0 : index
    %111 = vector.load %arg6[%110, %c0_32] : memref<64x32xf32, #tpu.memory_space<vmem>>, vector<8x32xf32>
    tpu.vector_store %arg6[%110, %c0_32], %109 {strides = array<i32>} : memref<64x32xf32, #tpu.memory_space<vmem>>, vector<8x32xf32>,
    %c3_i32 = arith.constant 3 : i32
    %c8_i32_33 = arith.constant 8 : i32
    %112 = arith.muli %c3_i32, %c8_i32_33 : i32
    %113 = tpu.assume_multiple %112, 8 : i32
    %114 = arith.index_cast %113 : i32 to index
    %c0_34 = arith.constant 0 : index
    %115 = vector.load %arg9[%114, %c0_34] : memref<64x128xf32, #tpu.memory_space<vmem>>, vector<8x128xf32>
    %116 = arith.truncf %109 : vector<8x32xf32> to vector<8x32xbf16>
    %cst_35 = arith.constant dense<0.000000e+00> : vector<8x128xf32>
    %117 = tpu.matmul %116, %7, %cst_35 {dimension_numbers = #tpu.dot_dimension_numbers<[1], [0], [0], [1], [0, 0, 1, 1], [], []>} : vector<8x32xbf16>, vector<32x128xbf16>, vector<8x128xf32> -> vector<8x128xf32>
    %118 = arith.addf %115, %117 : vector<8x128xf32>
    %119 = vector.extract_strided_slice %118 {offsets = [0, 0], sizes = [8, 32], strides = [1, 1]} : vector<8x128xf32> to vector<8x32xf32>
    %120 = arith.negf %119 : vector<8x32xf32>
    %121 = math.exp %120 : vector<8x32xf32>
    %cst_36 = arith.constant 1.000000e+00 : f32
    %122 = vector.broadcast %cst_36 : f32 to vector<8x32xf32>
    %123 = arith.addf %122, %121 : vector<8x32xf32>
    %124 = arith.divf %122, %123 : vector<8x32xf32>
    %125 = vector.extract_strided_slice %118 {offsets = [0, 32], sizes = [8, 32], strides = [1, 1]} : vector<8x128xf32> to vector<8x32xf32>
    %126 = arith.negf %125 : vector<8x32xf32>
    %127 = math.exp %126 : vector<8x32xf32>
    %cst_37 = arith.constant 1.000000e+00 : f32
    %128 = vector.broadcast %cst_37 : f32 to vector<8x32xf32>
    %129 = arith.addf %128, %127 : vector<8x32xf32>
    %130 = arith.divf %128, %129 : vector<8x32xf32>
    %131 = vector.extract_strided_slice %118 {offsets = [0, 64], sizes = [8, 32], strides = [1, 1]} : vector<8x128xf32> to vector<8x32xf32>
    %132 = math.tanh %131 : vector<8x32xf32>
    %133 = vector.extract_strided_slice %118 {offsets = [0, 96], sizes = [8, 32], strides = [1, 1]} : vector<8x128xf32> to vector<8x32xf32>
    %134 = arith.negf %133 : vector<8x32xf32>
    %135 = math.exp %134 : vector<8x32xf32>
    %cst_38 = arith.constant 1.000000e+00 : f32
    %136 = vector.broadcast %cst_38 : f32 to vector<8x32xf32>
    %137 = arith.addf %136, %135 : vector<8x32xf32>
    %138 = arith.divf %136, %137 : vector<8x32xf32>
    %139 = arith.mulf %130, %107 : vector<8x32xf32>
    %140 = arith.mulf %124, %132 : vector<8x32xf32>
    %141 = arith.addf %139, %140 : vector<8x32xf32>
    %142 = math.tanh %141 : vector<8x32xf32>
    %143 = arith.mulf %138, %142 : vector<8x32xf32>
    %144 = arith.index_cast %113 : i32 to index
    %c0_39 = arith.constant 0 : index
    %145 = vector.load %arg6[%144, %c0_39] : memref<64x32xf32, #tpu.memory_space<vmem>>, vector<8x32xf32>
    tpu.vector_store %arg6[%144, %c0_39], %143 {strides = array<i32>} : memref<64x32xf32, #tpu.memory_space<vmem>>, vector<8x32xf32>,
    %c4_i32 = arith.constant 4 : i32
    %c8_i32_40 = arith.constant 8 : i32
    %146 = arith.muli %c4_i32, %c8_i32_40 : i32
    %147 = tpu.assume_multiple %146, 8 : i32
    %148 = arith.index_cast %147 : i32 to index
    %c0_41 = arith.constant 0 : index
    %149 = vector.load %arg9[%148, %c0_41] : memref<64x128xf32, #tpu.memory_space<vmem>>, vector<8x128xf32>
    %150 = arith.truncf %143 : vector<8x32xf32> to vector<8x32xbf16>
    %cst_42 = arith.constant dense<0.000000e+00> : vector<8x128xf32>
    %151 = tpu.matmul %150, %7, %cst_42 {dimension_numbers = #tpu.dot_dimension_numbers<[1], [0], [0], [1], [0, 0, 1, 1], [], []>} : vector<8x32xbf16>, vector<32x128xbf16>, vector<8x128xf32> -> vector<8x128xf32>
    %152 = arith.addf %149, %151 : vector<8x128xf32>
    %153 = vector.extract_strided_slice %152 {offsets = [0, 0], sizes = [8, 32], strides = [1, 1]} : vector<8x128xf32> to vector<8x32xf32>
    %154 = arith.negf %153 : vector<8x32xf32>
    %155 = math.exp %154 : vector<8x32xf32>
    %cst_43 = arith.constant 1.000000e+00 : f32
    %156 = vector.broadcast %cst_43 : f32 to vector<8x32xf32>
    %157 = arith.addf %156, %155 : vector<8x32xf32>
    %158 = arith.divf %156, %157 : vector<8x32xf32>
    %159 = vector.extract_strided_slice %152 {offsets = [0, 32], sizes = [8, 32], strides = [1, 1]} : vector<8x128xf32> to vector<8x32xf32>
    %160 = arith.negf %159 : vector<8x32xf32>
    %161 = math.exp %160 : vector<8x32xf32>
    %cst_44 = arith.constant 1.000000e+00 : f32
    %162 = vector.broadcast %cst_44 : f32 to vector<8x32xf32>
    %163 = arith.addf %162, %161 : vector<8x32xf32>
    %164 = arith.divf %162, %163 : vector<8x32xf32>
    %165 = vector.extract_strided_slice %152 {offsets = [0, 64], sizes = [8, 32], strides = [1, 1]} : vector<8x128xf32> to vector<8x32xf32>
    %166 = math.tanh %165 : vector<8x32xf32>
    %167 = vector.extract_strided_slice %152 {offsets = [0, 96], sizes = [8, 32], strides = [1, 1]} : vector<8x128xf32> to vector<8x32xf32>
    %168 = arith.negf %167 : vector<8x32xf32>
    %169 = math.exp %168 : vector<8x32xf32>
    %cst_45 = arith.constant 1.000000e+00 : f32
    %170 = vector.broadcast %cst_45 : f32 to vector<8x32xf32>
    %171 = arith.addf %170, %169 : vector<8x32xf32>
    %172 = arith.divf %170, %171 : vector<8x32xf32>
    %173 = arith.mulf %164, %141 : vector<8x32xf32>
    %174 = arith.mulf %158, %166 : vector<8x32xf32>
    %175 = arith.addf %173, %174 : vector<8x32xf32>
    %176 = math.tanh %175 : vector<8x32xf32>
    %177 = arith.mulf %172, %176 : vector<8x32xf32>
    %178 = arith.index_cast %147 : i32 to index
    %c0_46 = arith.constant 0 : index
    %179 = vector.load %arg6[%178, %c0_46] : memref<64x32xf32, #tpu.memory_space<vmem>>, vector<8x32xf32>
    tpu.vector_store %arg6[%178, %c0_46], %177 {strides = array<i32>} : memref<64x32xf32, #tpu.memory_space<vmem>>, vector<8x32xf32>,
    %c5_i32 = arith.constant 5 : i32
    %c8_i32_47 = arith.constant 8 : i32
    %180 = arith.muli %c5_i32, %c8_i32_47 : i32
    %181 = tpu.assume_multiple %180, 8 : i32
    %182 = arith.index_cast %181 : i32 to index
    %c0_48 = arith.constant 0 : index
    %183 = vector.load %arg9[%182, %c0_48] : memref<64x128xf32, #tpu.memory_space<vmem>>, vector<8x128xf32>
    %184 = arith.truncf %177 : vector<8x32xf32> to vector<8x32xbf16>
    %cst_49 = arith.constant dense<0.000000e+00> : vector<8x128xf32>
    %185 = tpu.matmul %184, %7, %cst_49 {dimension_numbers = #tpu.dot_dimension_numbers<[1], [0], [0], [1], [0, 0, 1, 1], [], []>} : vector<8x32xbf16>, vector<32x128xbf16>, vector<8x128xf32> -> vector<8x128xf32>
    %186 = arith.addf %183, %185 : vector<8x128xf32>
    %187 = vector.extract_strided_slice %186 {offsets = [0, 0], sizes = [8, 32], strides = [1, 1]} : vector<8x128xf32> to vector<8x32xf32>
    %188 = arith.negf %187 : vector<8x32xf32>
    %189 = math.exp %188 : vector<8x32xf32>
    %cst_50 = arith.constant 1.000000e+00 : f32
    %190 = vector.broadcast %cst_50 : f32 to vector<8x32xf32>
    %191 = arith.addf %190, %189 : vector<8x32xf32>
    %192 = arith.divf %190, %191 : vector<8x32xf32>
    %193 = vector.extract_strided_slice %186 {offsets = [0, 32], sizes = [8, 32], strides = [1, 1]} : vector<8x128xf32> to vector<8x32xf32>
    %194 = arith.negf %193 : vector<8x32xf32>
    %195 = math.exp %194 : vector<8x32xf32>
    %cst_51 = arith.constant 1.000000e+00 : f32
    %196 = vector.broadcast %cst_51 : f32 to vector<8x32xf32>
    %197 = arith.addf %196, %195 : vector<8x32xf32>
    %198 = arith.divf %196, %197 : vector<8x32xf32>
    %199 = vector.extract_strided_slice %186 {offsets = [0, 64], sizes = [8, 32], strides = [1, 1]} : vector<8x128xf32> to vector<8x32xf32>
    %200 = math.tanh %199 : vector<8x32xf32>
    %201 = vector.extract_strided_slice %186 {offsets = [0, 96], sizes = [8, 32], strides = [1, 1]} : vector<8x128xf32> to vector<8x32xf32>
    %202 = arith.negf %201 : vector<8x32xf32>
    %203 = math.exp %202 : vector<8x32xf32>
    %cst_52 = arith.constant 1.000000e+00 : f32
    %204 = vector.broadcast %cst_52 : f32 to vector<8x32xf32>
    %205 = arith.addf %204, %203 : vector<8x32xf32>
    %206 = arith.divf %204, %205 : vector<8x32xf32>
    %207 = arith.mulf %198, %175 : vector<8x32xf32>
    %208 = arith.mulf %192, %200 : vector<8x32xf32>
    %209 = arith.addf %207, %208 : vector<8x32xf32>
    %210 = math.tanh %209 : vector<8x32xf32>
    %211 = arith.mulf %206, %210 : vector<8x32xf32>
    %212 = arith.index_cast %181 : i32 to index
    %c0_53 = arith.constant 0 : index
    %213 = vector.load %arg6[%212, %c0_53] : memref<64x32xf32, #tpu.memory_space<vmem>>, vector<8x32xf32>
    tpu.vector_store %arg6[%212, %c0_53], %211 {strides = array<i32>} : memref<64x32xf32, #tpu.memory_space<vmem>>, vector<8x32xf32>,
    %c6_i32 = arith.constant 6 : i32
    %c8_i32_54 = arith.constant 8 : i32
    %214 = arith.muli %c6_i32, %c8_i32_54 : i32
    %215 = tpu.assume_multiple %214, 8 : i32
    %216 = arith.index_cast %215 : i32 to index
    %c0_55 = arith.constant 0 : index
    %217 = vector.load %arg9[%216, %c0_55] : memref<64x128xf32, #tpu.memory_space<vmem>>, vector<8x128xf32>
    %218 = arith.truncf %211 : vector<8x32xf32> to vector<8x32xbf16>
    %cst_56 = arith.constant dense<0.000000e+00> : vector<8x128xf32>
    %219 = tpu.matmul %218, %7, %cst_56 {dimension_numbers = #tpu.dot_dimension_numbers<[1], [0], [0], [1], [0, 0, 1, 1], [], []>} : vector<8x32xbf16>, vector<32x128xbf16>, vector<8x128xf32> -> vector<8x128xf32>
    %220 = arith.addf %217, %219 : vector<8x128xf32>
    %221 = vector.extract_strided_slice %220 {offsets = [0, 0], sizes = [8, 32], strides = [1, 1]} : vector<8x128xf32> to vector<8x32xf32>
    %222 = arith.negf %221 : vector<8x32xf32>
    %223 = math.exp %222 : vector<8x32xf32>
    %cst_57 = arith.constant 1.000000e+00 : f32
    %224 = vector.broadcast %cst_57 : f32 to vector<8x32xf32>
    %225 = arith.addf %224, %223 : vector<8x32xf32>
    %226 = arith.divf %224, %225 : vector<8x32xf32>
    %227 = vector.extract_strided_slice %220 {offsets = [0, 32], sizes = [8, 32], strides = [1, 1]} : vector<8x128xf32> to vector<8x32xf32>
    %228 = arith.negf %227 : vector<8x32xf32>
    %229 = math.exp %228 : vector<8x32xf32>
    %cst_58 = arith.constant 1.000000e+00 : f32
    %230 = vector.broadcast %cst_58 : f32 to vector<8x32xf32>
    %231 = arith.addf %230, %229 : vector<8x32xf32>
    %232 = arith.divf %230, %231 : vector<8x32xf32>
    %233 = vector.extract_strided_slice %220 {offsets = [0, 64], sizes = [8, 32], strides = [1, 1]} : vector<8x128xf32> to vector<8x32xf32>
    %234 = math.tanh %233 : vector<8x32xf32>
    %235 = vector.extract_strided_slice %220 {offsets = [0, 96], sizes = [8, 32], strides = [1, 1]} : vector<8x128xf32> to vector<8x32xf32>
    %236 = arith.negf %235 : vector<8x32xf32>
    %237 = math.exp %236 : vector<8x32xf32>
    %cst_59 = arith.constant 1.000000e+00 : f32
    %238 = vector.broadcast %cst_59 : f32 to vector<8x32xf32>
    %239 = arith.addf %238, %237 : vector<8x32xf32>
    %240 = arith.divf %238, %239 : vector<8x32xf32>
    %241 = arith.mulf %232, %209 : vector<8x32xf32>
    %242 = arith.mulf %226, %234 : vector<8x32xf32>
    %243 = arith.addf %241, %242 : vector<8x32xf32>
    %244 = math.tanh %243 : vector<8x32xf32>
    %245 = arith.mulf %240, %244 : vector<8x32xf32>
    %246 = arith.index_cast %215 : i32 to index
    %c0_60 = arith.constant 0 : index
    %247 = vector.load %arg6[%246, %c0_60] : memref<64x32xf32, #tpu.memory_space<vmem>>, vector<8x32xf32>
    tpu.vector_store %arg6[%246, %c0_60], %245 {strides = array<i32>} : memref<64x32xf32, #tpu.memory_space<vmem>>, vector<8x32xf32>,
    %c7_i32 = arith.constant 7 : i32
    %c8_i32_61 = arith.constant 8 : i32
    %248 = arith.muli %c7_i32, %c8_i32_61 : i32
    %249 = tpu.assume_multiple %248, 8 : i32
    %250 = arith.index_cast %249 : i32 to index
    %c0_62 = arith.constant 0 : index
    %251 = vector.load %arg9[%250, %c0_62] : memref<64x128xf32, #tpu.memory_space<vmem>>, vector<8x128xf32>
    %252 = arith.truncf %245 : vector<8x32xf32> to vector<8x32xbf16>
    %cst_63 = arith.constant dense<0.000000e+00> : vector<8x128xf32>
    %253 = tpu.matmul %252, %7, %cst_63 {dimension_numbers = #tpu.dot_dimension_numbers<[1], [0], [0], [1], [0, 0, 1, 1], [], []>} : vector<8x32xbf16>, vector<32x128xbf16>, vector<8x128xf32> -> vector<8x128xf32>
    %254 = arith.addf %251, %253 : vector<8x128xf32>
    %255 = vector.extract_strided_slice %254 {offsets = [0, 0], sizes = [8, 32], strides = [1, 1]} : vector<8x128xf32> to vector<8x32xf32>
    %256 = arith.negf %255 : vector<8x32xf32>
    %257 = math.exp %256 : vector<8x32xf32>
    %cst_64 = arith.constant 1.000000e+00 : f32
    %258 = vector.broadcast %cst_64 : f32 to vector<8x32xf32>
    %259 = arith.addf %258, %257 : vector<8x32xf32>
    %260 = arith.divf %258, %259 : vector<8x32xf32>
    %261 = vector.extract_strided_slice %254 {offsets = [0, 32], sizes = [8, 32], strides = [1, 1]} : vector<8x128xf32> to vector<8x32xf32>
    %262 = arith.negf %261 : vector<8x32xf32>
    %263 = math.exp %262 : vector<8x32xf32>
    %cst_65 = arith.constant 1.000000e+00 : f32
    %264 = vector.broadcast %cst_65 : f32 to vector<8x32xf32>
    %265 = arith.addf %264, %263 : vector<8x32xf32>
    %266 = arith.divf %264, %265 : vector<8x32xf32>
    %267 = vector.extract_strided_slice %254 {offsets = [0, 64], sizes = [8, 32], strides = [1, 1]} : vector<8x128xf32> to vector<8x32xf32>
    %268 = math.tanh %267 : vector<8x32xf32>
    %269 = vector.extract_strided_slice %254 {offsets = [0, 96], sizes = [8, 32], strides = [1, 1]} : vector<8x128xf32> to vector<8x32xf32>
    %270 = arith.negf %269 : vector<8x32xf32>
    %271 = math.exp %270 : vector<8x32xf32>
    %cst_66 = arith.constant 1.000000e+00 : f32
    %272 = vector.broadcast %cst_66 : f32 to vector<8x32xf32>
    %273 = arith.addf %272, %271 : vector<8x32xf32>
    %274 = arith.divf %272, %273 : vector<8x32xf32>
    %275 = arith.mulf %266, %243 : vector<8x32xf32>
    %276 = arith.mulf %260, %268 : vector<8x32xf32>
    %277 = arith.addf %275, %276 : vector<8x32xf32>
    %278 = math.tanh %277 : vector<8x32xf32>
    %279 = arith.mulf %274, %278 : vector<8x32xf32>
    %280 = arith.index_cast %249 : i32 to index
    %c0_67 = arith.constant 0 : index
    %281 = vector.load %arg6[%280, %c0_67] : memref<64x32xf32, #tpu.memory_space<vmem>>, vector<8x32xf32>
    tpu.vector_store %arg6[%280, %c0_67], %279 {strides = array<i32>} : memref<64x32xf32, #tpu.memory_space<vmem>>, vector<8x32xf32>,
    %c8_i32_68 = arith.constant 8 : i32
    %c0_69 = arith.constant 0 : index
    %c0_70 = arith.constant 0 : index
    %282 = vector.load %arg7[%c0_69, %c0_70] : memref<8x32xf32, #tpu.memory_space<vmem>>, vector<8x32xf32>
    tpu.vector_store %arg7[%c0_69, %c0_70], %279 {strides = array<i32>} : memref<8x32xf32, #tpu.memory_space<vmem>>, vector<8x32xf32>,
    %c0_71 = arith.constant 0 : index
    %c0_72 = arith.constant 0 : index
    %283 = vector.load %arg8[%c0_71, %c0_72] : memref<8x32xf32, #tpu.memory_space<vmem>>, vector<8x32xf32>
    tpu.vector_store %arg8[%c0_71, %c0_72], %277 {strides = array<i32>} : memref<8x32xf32, #tpu.memory_space<vmem>>, vector<8x32xf32>,
    return
  }
}

</mosaic_0001>

<llo_original>
// kernel: tpu_custom_call.1
$region0: #{tpu_custom_call.1}
  #allocation0 [shape = 'u32[]', space=smem, size = 0x4, offset = 0x4, fixed_abs, tag = 'smem constant byte address 0x4 - core index']
  #allocation1 [shape = 'u32[144,128]{1,0:T(1,128)}', space=vmem, size = 0x12000, scoped, tag = 'internal scratch']
  #allocation2 [shape = 'f32[64,128]{1,0:T(8,128)}', space=vmem, size = 0x8000, scoped, tag = 'scratch operand']
  %s0 = inlined_call_operand.vmem [shape: bf16[64,32], index: 0, kind: input, shape index: {}]
  %s1 = inlined_call_operand.vmem [shape: bf16[32,128], index: 1, kind: input, shape index: {}]
  %s2 = inlined_call_operand.vmem [shape: bf16[32,128], index: 2, kind: input, shape index: {}]
  %s3 = inlined_call_operand.vmem [shape: f32[1,128], index: 3, kind: input, shape index: {}]
  %s4 = inlined_call_operand.vmem [shape: f32[8,32], index: 4, kind: input, shape index: {}]
  %s5 = inlined_call_operand.vmem [shape: f32[8,32], index: 5, kind: input, shape index: {}]
  %s6 = inlined_call_operand.vmem [shape: f32[64,32], index: 6, kind: output, shape index: {0}]
  %s7 = inlined_call_operand.hbm [shape: f32[8,32], index: 7, kind: output, shape index: {1}]
  %s8 = inlined_call_operand.hbm [shape: f32[8,32], index: 8, kind: output, shape index: {2}]
  %9 = xla_tuple %s6, %s7, %s8
  %s10 = sld [smem:[#allocation0]]
  $region50: #{tpu_custom_call.1} parent=0
    _
  %s12 = ssub.s32 1, %s10
  %s13 = scalar_select 0, %s12, %s10
  $region1: #{tpu_custom_call.1} parent=0
    #allocation3 [shape = 'u8[4096]{0}', space=vmem, size = 0x1000, scoped, tag = 'output window, operand 1, single buffered']
    #allocation4 [shape = 's32[1]{0}', space=sflag, size = 0x4, scoped, tag = 'scoped memory for tpu_custom_call.1']
    #allocation5 [shape = 'u8[4096]{0}', space=vmem, size = 0x1000, scoped, tag = 'output window, operand 2, single buffered']
    #allocation6 [shape = 's32[1]{0}', space=sflag, size = 0x4, scoped, tag = 'scoped memory for tpu_custom_call.1']
    %14 = vsyncpa [#allocation4], 0
    %15 = vsyncpa [#allocation6], 0
    // Predicated region
    $region2: #{tpu_custom_call.1} parent=1 // pred_check
      _
    $region3: #{tpu_custom_call.1} parent=1 // pred_check_branch
      %17 = sbr.rel (0) target = $region5
    $region4: #{tpu_custom_call.1} parent=1 // pred_region
      _
    $region5: #{tpu_custom_call.1} parent=1 // pred_fallthru
      _
    // Predicated region
    $region6: #{tpu_custom_call.1} parent=1 // pred_check
      _
    $region7: #{tpu_custom_call.1} parent=1 // pred_check_branch
      %19 = sbr.rel (0) target = $region9
    $region8: #{tpu_custom_call.1} parent=1 // pred_region
      _
    $region9: #{tpu_custom_call.1} parent=1 // pred_fallthru
      _
    // Predicated region
    $region10: #{tpu_custom_call.1} parent=1 // pred_check
      _
    $region11: #{tpu_custom_call.1} parent=1 // pred_check_branch
      %21 = sbr.rel (0) target = $region13
    $region12: #{tpu_custom_call.1} parent=1 // pred_region
      _
    $region13: #{tpu_custom_call.1} parent=1 // pred_fallthru
      _
    // Predicated region
    $region14: #{tpu_custom_call.1} parent=1 // pred_check
      _
    $region15: #{tpu_custom_call.1} parent=1 // pred_check_branch
      %23 = sbr.rel (0) target = $region17
    $region16: #{tpu_custom_call.1} parent=1 // pred_region
      _
    $region17: #{tpu_custom_call.1} parent=1 // pred_fallthru
      _
    // Predicated region
    $region18: #{tpu_custom_call.1} parent=1 // pred_check
      _
    $region19: #{tpu_custom_call.1} parent=1 // pred_check_branch
      %25 = sbr.rel (0) target = $region21
    $region20: #{tpu_custom_call.1} parent=1 // pred_region
      _
    $region21: #{tpu_custom_call.1} parent=1 // pred_fallthru
      _
    // Predicated region
    $region22: #{tpu_custom_call.1} parent=1 // pred_check
      _
    $region23: #{tpu_custom_call.1} parent=1 // pred_check_branch
      %27 = sbr.rel (0) target = $region25
    $region24: #{tpu_custom_call.1} parent=1 // pred_region
      _
    $region25: #{tpu_custom_call.1} parent=1 // pred_fallthru
      _
    %v29 = vld [vmem:[%s0] sm:$0xf]
    %v30 = vld [vmem:[%s0 + $0x4] sm:$0xf]
    %v31 = vld [vmem:[%s0 + $0x8] sm:$0xf]
    %v32 = vld [vmem:[%s0 + $0xc] sm:$0xf]
    %v33 = vld [vmem:[%s0 + $0x10] sm:$0xf]
    %v34 = vld [vmem:[%s0 + $0x14] sm:$0xf]
    %v35 = vld [vmem:[%s0 + $0x18] sm:$0xf]
    %v36 = vld [vmem:[%s0 + $0x1c] sm:$0xf]
    %v37 = vld [vmem:[%s1] sm:$0xf]
    %v38 = vld [vmem:[%s1 + $0x4] sm:$0xf]
    %v39 = vld [vmem:[%s1 + $0x8] sm:$0xf]
    %v40 = vld [vmem:[%s1 + $0xc] sm:$0xf]
    %v41 = vld [vmem:[%s3] sm:$0x1]
    %v43 = vlaneseq
    %v44 = vshrl.u32 %v43, 7
    %v45 = vsub.s32 0, %v44
    %v46 = vrot.slane %v41, %v45
    %v56 = vunpack.c.l.b16 %v29
    %v57 = vunpack.c.l.b16 %v30
    %v58 = vunpack.c.l.b16 %v31
    %v59 = vunpack.c.l.b16 %v32
    %v60 = vunpack.c.l.b16 %v33
    %v61 = vunpack.c.l.b16 %v34
    %v62 = vunpack.c.l.b16 %v35
    %v63 = vunpack.c.l.b16 %v36
    %v64 = vpack.c.b16 %v57, %v56
    %v65 = vpack.c.b16 %v59, %v58
    %v66 = vpack.c.b16 %v61, %v60
    %v67 = vpack.c.b16 %v63, %v62
    %v72 = vunpack.c.l.b16 %v37
    %v73 = vunpack.c.l.b16 %v38
    %v74 = vunpack.c.l.b16 %v39
    %v75 = vunpack.c.l.b16 %v40
    %v76 = vpack.c.b16 %v73, %v72
    %v77 = vpack.c.b16 %v75, %v74
    %vm80 = vcmask 261120
    %v82 = vsel %vm80, %v64, 0
    %v85 = vsel %vm80, %v65, 0
    %v88 = vsel %vm80, %v66, 0
    %v91 = vsel %vm80, %v67, 0
    %93 = vmatprep.subr.bf16.mxu0 0
    %94 = vmatpush1.bf16.msra.mxu0 %v76
    %95 = vmatprep.subr.bf16.mxu0 0
    %96 = vmatpush1.bf16.msra.mxu0 %v77
    %97 = vmatprep.subr.bf16.mxu0 0
    %98 = vmatpush1.bf16.msra.mxu0 0
    %99 = vmatprep.subr.bf16.mxu0 0
    %100 = vmatpush1.bf16.msra.mxu0 0
    %101 = vmatprep.subr.bf16.mxu0 0
    %102 = vmatpush1.bf16.msra.mxu0 0
    %103 = vmatprep.subr.bf16.mxu0 0
    %104 = vmatpush1.bf16.msra.mxu0 0
    %105 = vmatprep.subr.bf16.mxu0 0
    %106 = vmatpush1.bf16.msra.mxu0 0
    %107 = vmatprep.subr.bf16.mxu0 0
    %108 = vmatpush1.bf16.msra.mxu0 0
    %109 = vmatprep.subr.bf16.mxu0 0
    %110 = vmatpush1.bf16.msra.mxu0 0
    %111 = vmatprep.subr.bf16.mxu0 0
    %112 = vmatpush1.bf16.msra.mxu0 0
    %113 = vmatprep.subr.bf16.mxu0 0
    %114 = vmatpush1.bf16.msra.mxu0 0
    %115 = vmatprep.subr.bf16.mxu0 0
    %116 = vmatpush1.bf16.msra.mxu0 0
    %117 = vmatprep.subr.bf16.mxu0 0
    %118 = vmatpush1.bf16.msra.mxu0 0
    %119 = vmatprep.subr.bf16.mxu0 0
    %120 = vmatpush1.bf16.msra.mxu0 0
    %121 = vmatprep.subr.bf16.mxu0 0
    %122 = vmatpush1.bf16.msra.mxu0 0
    %123 = vmatprep.subr.bf16.mxu0 0
    %124 = vmatpush1.bf16.msra.mxu0 0
    %125 = vmatprep.mubr.bf16.mxu0 0
    %126 = vmatmul.mubr.bf16.gmra.mrb[0].mxu0 %v82
    %v127 = vpop.f32.mrb[0].mxu0
    %v128 = vadd.f32 %v46, %v127
    %v129 = vpop.f32.mrb[0].mxu0
    %v130 = vpop.f32.mrb[0].mxu0
    %v131 = vadd.f32 %v46, %v130
    %v132 = vpop.f32.mrb[0].mxu0
    %133 = vmatprep.mubr.bf16.mxu0 0
    %134 = vmatmul.mubr.bf16.gmra.mrb[0].mxu0 %v85
    %v135 = vpop.f32.mrb[0].mxu0
    %v136 = vadd.f32 %v46, %v135
    %v137 = vpop.f32.mrb[0].mxu0
    %v138 = vpop.f32.mrb[0].mxu0
    %v139 = vadd.f32 %v46, %v138
    %v140 = vpop.f32.mrb[0].mxu0
    %141 = vmatprep.mubr.bf16.mxu0 0
    %142 = vmatmul.mubr.bf16.gmra.mrb[0].mxu0 %v88
    %v143 = vpop.f32.mrb[0].mxu0
    %v144 = vadd.f32 %v46, %v143
    %v145 = vpop.f32.mrb[0].mxu0
    %v146 = vpop.f32.mrb[0].mxu0
    %v147 = vadd.f32 %v46, %v146
    %v148 = vpop.f32.mrb[0].mxu0
    %149 = vmatprep.mubr.bf16.mxu0 0
    %150 = vmatmul.mubr.bf16.gmra.mrb[0].mxu0 %v91
    %v151 = vpop.f32.mrb[0].mxu0
    %v152 = vadd.f32 %v46, %v151
    %v153 = vpop.f32.mrb[0].mxu0
    %v154 = vpop.f32.mrb[0].mxu0
    %v155 = vadd.f32 %v46, %v154
    %v156 = vpop.f32.mrb[0].mxu0
    %157 = vdwg.mxu0
    %158 = vst [vmem:[#allocation2] sm:$0xff] %v128
    %159 = vst [vmem:[#allocation2 + $0x8] sm:$0xff] %v131
    %160 = vst [vmem:[#allocation2 + $0x10] sm:$0xff] %v136
    %161 = vst [vmem:[#allocation2 + $0x18] sm:$0xff] %v139
    %162 = vst [vmem:[#allocation2 + $0x20] sm:$0xff] %v144
    %163 = vst [vmem:[#allocation2 + $0x28] sm:$0xff] %v147
    %164 = vst [vmem:[#allocation2 + $0x30] sm:$0xff] %v152
    %165 = vst [vmem:[#allocation2 + $0x38] sm:$0xff] %v155
    %v166 = vld [vmem:[%s2] sm:$0xf]
    %v167 = vld [vmem:[%s2 + $0x4] sm:$0xf]
    %v168 = vld [vmem:[%s2 + $0x8] sm:$0xf]
    %v169 = vld [vmem:[%s2 + $0xc] sm:$0xf]
    %v170 = vld [vmem:[%s4] sm:$0xff]
    %v171 = vld [vmem:[%s5] sm:$0xff]
    %v172 = vld [vmem:[#allocation2] sm:$0xff]
    %v173 = vpack.c.bf16 %v170, %v170
    %v178 = vunpack.c.l.b16 %v166
    %v179 = vunpack.c.l.b16 %v167
    %v180 = vunpack.c.l.b16 %v168
    %v181 = vunpack.c.l.b16 %v169
    %v182 = vpack.c.b16 %v179, %v178
    %v183 = vpack.c.b16 %v181, %v180
    %v187 = vsel %vm80, %v173, 0
    %189 = vmatprep.subr.bf16.mxu0 0
    %190 = vmatpush1.bf16.msra.mxu0 %v182
    %191 = vmatprep.subr.bf16.mxu0 0
    %192 = vmatpush1.bf16.msra.mxu0 %v183
    %193 = vmatprep.subr.bf16.mxu0 0
    %194 = vmatpush1.bf16.msra.mxu0 0
    %195 = vmatprep.subr.bf16.mxu0 0
    %196 = vmatpush1.bf16.msra.mxu0 0
    %197 = vmatprep.subr.bf16.mxu0 0
    %198 = vmatpush1.bf16.msra.mxu0 0
    %199 = vmatprep.subr.bf16.mxu0 0
    %200 = vmatpush1.bf16.msra.mxu0 0
    %201 = vmatprep.subr.bf16.mxu0 0
    %202 = vmatpush1.bf16.msra.mxu0 0
    %203 = vmatprep.subr.bf16.mxu0 0
    %204 = vmatpush1.bf16.msra.mxu0 0
    %205 = vmatprep.subr.bf16.mxu0 0
    %206 = vmatpush1.bf16.msra.mxu0 0
    %207 = vmatprep.subr.bf16.mxu0 0
    %208 = vmatpush1.bf16.msra.mxu0 0
    %209 = vmatprep.subr.bf16.mxu0 0
    %210 = vmatpush1.bf16.msra.mxu0 0
    %211 = vmatprep.subr.bf16.mxu0 0
    %212 = vmatpush1.bf16.msra.mxu0 0
    %213 = vmatprep.subr.bf16.mxu0 0
    %214 = vmatpush1.bf16.msra.mxu0 0
    %215 = vmatprep.subr.bf16.mxu0 0
    %216 = vmatpush1.bf16.msra.mxu0 0
    %217 = vmatprep.subr.bf16.mxu0 0
    %218 = vmatpush1.bf16.msra.mxu0 0
    %219 = vmatprep.subr.bf16.mxu0 0
    %220 = vmatpush1.bf16.msra.mxu0 0
    %221 = vmatprep.mubr.bf16.mxu0 0
    %222 = vmatmul.mubr.bf16.gmra.mrb[0].mxu0 %v187
    %v223 = vpop.f32.mrb[0].mxu0
    %v224 = vadd.f32 0.0, %v223
    %v225 = vpop.f32.mrb[0].mxu0
    %v226 = vpop.f32.mrb[0].mxu0
    %v227 = vpop.f32.mrb[0].mxu0
    %228 = vdwg.mxu0
    %v229 = vadd.f32 %v172, %v224
    %v230 = vxor.u32 %v229, 2147483648
    %v231 = vmul.f32 %v230, 1.442695
    %v232 = vpow.pop %v231
    %v233 = vadd.f32 %v232, 1.0
    %v234 = vrcp.pop %v233
    %v235 = vmul.f32 1.0, %v234
    %v236 = vtanh.pop %v229
    %238 = vrot.lane.b32.xlu0 %v171, 32
    %v239 = vpop.permute.xlu0 %238
    %v241 = vmul.f32 %v235, %v239
    %243 = vrot.lane.b32.xlu0 %v236, 64
    %v244 = vpop.permute.xlu0 %243
    %v246 = vmul.f32 %v235, %v244
    %248 = vrot.lane.b32.xlu0 %v246, 32
    %v249 = vpop.permute.xlu0 %248
    %v251 = vadd.f32 %v241, %v249
    %v252 = vtanh.pop %v251
    %254 = vrot.lane.b32.xlu0 %v252, 64
    %v255 = vpop.permute.xlu0 %254
    %v257 = vmul.f32 %v235, %v255
    %259 = vrot.lane.b32.xlu0 %v257, 32
    %v260 = vpop.permute.xlu0 %259
    %262 = vst.msk [vmem:[%s6] sm:$0xff] %vm80, %v260
    %s263 = scalar_lea.vmem [#allocation2], 8
    %v264 = vld [vmem:[%s263] sm:$0xff]
    %v265 = vpack.c.bf16 %v257, %v257
    %267 = vrot.lane.b32.xlu0 %v265, 32
    %v268 = vpop.permute.xlu0 %267
    %v270 = vsel %vm80, %v268, 0
    %272 = vmatprep.subr.bf16.mxu0 0
    %273 = vmatpush1.bf16.msra.mxu0 %v182
    %274 = vmatprep.subr.bf16.mxu0 0
    %275 = vmatpush1.bf16.msra.mxu0 %v183
    %276 = vmatprep.subr.bf16.mxu0 0
    %277 = vmatpush1.bf16.msra.mxu0 0
    %278 = vmatprep.subr.bf16.mxu0 0
    %279 = vmatpush1.bf16.msra.mxu0 0
    %280 = vmatprep.subr.bf16.mxu0 0
    %281 = vmatpush1.bf16.msra.mxu0 0
    %282 = vmatprep.subr.bf16.mxu0 0
    %283 = vmatpush1.bf16.msra.mxu0 0
    %284 = vmatprep.subr.bf16.mxu0 0
    %285 = vmatpush1.bf16.msra.mxu0 0
    %286 = vmatprep.subr.bf16.mxu0 0
    %287 = vmatpush1.bf16.msra.mxu0 0
    %288 = vmatprep.subr.bf16.mxu0 0
    %289 = vmatpush1.bf16.msra.mxu0 0
    %290 = vmatprep.subr.bf16.mxu0 0
    %291 = vmatpush1.bf16.msra.mxu0 0
    %292 = vmatprep.subr.bf16.mxu0 0
    %293 = vmatpush1.bf16.msra.mxu0 0
    %294 = vmatprep.subr.bf16.mxu0 0
    %295 = vmatpush1.bf16.msra.mxu0 0
    %296 = vmatprep.subr.bf16.mxu0 0
    %297 = vmatpush1.bf16.msra.mxu0 0
    %298 = vmatprep.subr.bf16.mxu0 0
    %299 = vmatpush1.bf16.msra.mxu0 0
    %300 = vmatprep.subr.bf16.mxu0 0
    %301 = vmatpush1.bf16.msra.mxu0 0
    %302 = vmatprep.subr.bf16.mxu0 0
    %303 = vmatpush1.bf16.msra.mxu0 0
    %304 = vmatprep.mubr.bf16.mxu0 0
    %305 = vmatmul.mubr.bf16.gmra.mrb[0].mxu0 %v270
    %v306 = vpop.f32.mrb[0].mxu0
    %v307 = vadd.f32 0.0, %v306
    %v308 = vpop.f32.mrb[0].mxu0
    %v309 = vpop.f32.mrb[0].mxu0
    %v310 = vpop.f32.mrb[0].mxu0
    %311 = vdwg.mxu0
    %v312 = vadd.f32 %v264, %v307
    %v313 = vxor.u32 %v312, 2147483648
    %v314 = vmul.f32 %v313, 1.442695
    %v315 = vpow.pop %v314
    %v316 = vadd.f32 %v315, 1.0
    %v317 = vrcp.pop %v316
    %v318 = vmul.f32 1.0, %v317
    %v319 = vtanh.pop %v312
    %v320 = vmul.f32 %v318, %v251
    %322 = vrot.lane.b32.xlu0 %v319, 64
    %v323 = vpop.permute.xlu0 %322
    %v325 = vmul.f32 %v318, %v323
    %327 = vrot.lane.b32.xlu0 %v325, 32
    %v328 = vpop.permute.xlu0 %327
    %v330 = vadd.f32 %v320, %v328
    %v331 = vtanh.pop %v330
    %333 = vrot.lane.b32.xlu0 %v331, 64
    %v334 = vpop.permute.xlu0 %333
    %v336 = vmul.f32 %v318, %v334
    %338 = vrot.lane.b32.xlu0 %v336, 32
    %v339 = vpop.permute.xlu0 %338
    %s341 = scalar_lea.vmem %s6, 8
    %342 = vst.msk [vmem:[%s341] sm:$0xff] %vm80, %v339
    %s343 = scalar_lea.vmem [#allocation2], 16
    %v344 = vld [vmem:[%s343] sm:$0xff]
    %v345 = vpack.c.bf16 %v336, %v336
    %347 = vrot.lane.b32.xlu0 %v345, 32
    %v348 = vpop.permute.xlu0 %347
    %v350 = vsel %vm80, %v348, 0
    %352 = vmatprep.subr.bf16.mxu0 0
    %353 = vmatpush1.bf16.msra.mxu0 %v182
    %354 = vmatprep.subr.bf16.mxu0 0
    %355 = vmatpush1.bf16.msra.mxu0 %v183
    %356 = vmatprep.subr.bf16.mxu0 0
    %357 = vmatpush1.bf16.msra.mxu0 0
    %358 = vmatprep.subr.bf16.mxu0 0
    %359 = vmatpush1.bf16.msra.mxu0 0
    %360 = vmatprep.subr.bf16.mxu0 0
    %361 = vmatpush1.bf16.msra.mxu0 0
    %362 = vmatprep.subr.bf16.mxu0 0
    %363 = vmatpush1.bf16.msra.mxu0 0
    %364 = vmatprep.subr.bf16.mxu0 0
    %365 = vmatpush1.bf16.msra.mxu0 0
    %366 = vmatprep.subr.bf16.mxu0 0
    %367 = vmatpush1.bf16.msra.mxu0 0
    %368 = vmatprep.subr.bf16.mxu0 0
    %369 = vmatpush1.bf16.msra.mxu0 0
    %370 = vmatprep.subr.bf16.mxu0 0
    %371 = vmatpush1.bf16.msra.mxu0 0
    %372 = vmatprep.subr.bf16.mxu0 0
    %373 = vmatpush1.bf16.msra.mxu0 0
    %374 = vmatprep.subr.bf16.mxu0 0
    %375 = vmatpush1.bf16.msra.mxu0 0
    %376 = vmatprep.subr.bf16.mxu0 0
    %377 = vmatpush1.bf16.msra.mxu0 0
    %378 = vmatprep.subr.bf16.mxu0 0
    %379 = vmatpush1.bf16.msra.mxu0 0
    %380 = vmatprep.subr.bf16.mxu0 0
    %381 = vmatpush1.bf16.msra.mxu0 0
    %382 = vmatprep.subr.bf16.mxu0 0
    %383 = vmatpush1.bf16.msra.mxu0 0
    %384 = vmatprep.mubr.bf16.mxu0 0
    %385 = vmatmul.mubr.bf16.gmra.mrb[0].mxu0 %v350
    %v386 = vpop.f32.mrb[0].mxu0
    %v387 = vadd.f32 0.0, %v386
    %v388 = vpop.f32.mrb[0].mxu0
    %v389 = vpop.f32.mrb[0].mxu0
    %v390 = vpop.f32.mrb[0].mxu0
    %391 = vdwg.mxu0
    %v392 = vadd.f32 %v344, %v387
    %v393 = vxor.u32 %v392, 2147483648
    %v394 = vmul.f32 %v393, 1.442695
    %v395 = vpow.pop %v394
    %v396 = vadd.f32 %v395, 1.0
    %v397 = vrcp.pop %v396
    %v398 = vmul.f32 1.0, %v397
    %v399 = vtanh.pop %v392
    %v400 = vmul.f32 %v398, %v330
    %402 = vrot.lane.b32.xlu0 %v399, 64
    %v403 = vpop.permute.xlu0 %402
    %v405 = vmul.f32 %v398, %v403
    %407 = vrot.lane.b32.xlu0 %v405, 32
    %v408 = vpop.permute.xlu0 %407
    %v410 = vadd.f32 %v400, %v408
    %v411 = vtanh.pop %v410
    %413 = vrot.lane.b32.xlu0 %v411, 64
    %v414 = vpop.permute.xlu0 %413
    %v416 = vmul.f32 %v398, %v414
    %418 = vrot.lane.b32.xlu0 %v416, 32
    %v419 = vpop.permute.xlu0 %418
    %s421 = scalar_lea.vmem %s6, 16
    %422 = vst.msk [vmem:[%s421] sm:$0xff] %vm80, %v419
    %s423 = scalar_lea.vmem [#allocation2], 24
    %v424 = vld [vmem:[%s423] sm:$0xff]
    %v425 = vpack.c.bf16 %v416, %v416
    %427 = vrot.lane.b32.xlu0 %v425, 32
    %v428 = vpop.permute.xlu0 %427
    %v430 = vsel %vm80, %v428, 0
    %432 = vmatprep.subr.bf16.mxu0 0
    %433 = vmatpush1.bf16.msra.mxu0 %v182
    %434 = vmatprep.subr.bf16.mxu0 0
    %435 = vmatpush1.bf16.msra.mxu0 %v183
    %436 = vmatprep.subr.bf16.mxu0 0
    %437 = vmatpush1.bf16.msra.mxu0 0
    %438 = vmatprep.subr.bf16.mxu0 0
    %439 = vmatpush1.bf16.msra.mxu0 0
    %440 = vmatprep.subr.bf16.mxu0 0
    %441 = vmatpush1.bf16.msra.mxu0 0
    %442 = vmatprep.subr.bf16.mxu0 0
    %443 = vmatpush1.bf16.msra.mxu0 0
    %444 = vmatprep.subr.bf16.mxu0 0
    %445 = vmatpush1.bf16.msra.mxu0 0
    %446 = vmatprep.subr.bf16.mxu0 0
    %447 = vmatpush1.bf16.msra.mxu0 0
    %448 = vmatprep.subr.bf16.mxu0 0
    %449 = vmatpush1.bf16.msra.mxu0 0
    %450 = vmatprep.subr.bf16.mxu0 0
    %451 = vmatpush1.bf16.msra.mxu0 0
    %452 = vmatprep.subr.bf16.mxu0 0
    %453 = vmatpush1.bf16.msra.mxu0 0
    %454 = vmatprep.subr.bf16.mxu0 0
    %455 = vmatpush1.bf16.msra.mxu0 0
    %456 = vmatprep.subr.bf16.mxu0 0
    %457 = vmatpush1.bf16.msra.mxu0 0
    %458 = vmatprep.subr.bf16.mxu0 0
    %459 = vmatpush1.bf16.msra.mxu0 0
    %460 = vmatprep.subr.bf16.mxu0 0
    %461 = vmatpush1.bf16.msra.mxu0 0
    %462 = vmatprep.subr.bf16.mxu0 0
    %463 = vmatpush1.bf16.msra.mxu0 0
    %464 = vmatprep.mubr.bf16.mxu0 0
    %465 = vmatmul.mubr.bf16.gmra.mrb[0].mxu0 %v430
    %v466 = vpop.f32.mrb[0].mxu0
    %v467 = vadd.f32 0.0, %v466
    %v468 = vpop.f32.mrb[0].mxu0
    %v469 = vpop.f32.mrb[0].mxu0
    %v470 = vpop.f32.mrb[0].mxu0
    %471 = vdwg.mxu0
    %v472 = vadd.f32 %v424, %v467
    %v473 = vxor.u32 %v472, 2147483648
    %v474 = vmul.f32 %v473, 1.442695
    %v475 = vpow.pop %v474
    %v476 = vadd.f32 %v475, 1.0
    %v477 = vrcp.pop %v476
    %v478 = vmul.f32 1.0, %v477
    %v479 = vtanh.pop %v472
    %v480 = vmul.f32 %v478, %v410
    %482 = vrot.lane.b32.xlu0 %v479, 64
    %v483 = vpop.permute.xlu0 %482
    %v485 = vmul.f32 %v478, %v483
    %487 = vrot.lane.b32.xlu0 %v485, 32
    %v488 = vpop.permute.xlu0 %487
    %v490 = vadd.f32 %v480, %v488
    %v491 = vtanh.pop %v490
    %493 = vrot.lane.b32.xlu0 %v491, 64
    %v494 = vpop.permute.xlu0 %493
    %v496 = vmul.f32 %v478, %v494
    %498 = vrot.lane.b32.xlu0 %v496, 32
    %v499 = vpop.permute.xlu0 %498
    %s501 = scalar_lea.vmem %s6, 24
    %502 = vst.msk [vmem:[%s501] sm:$0xff] %vm80, %v499
    %s503 = scalar_lea.vmem [#allocation2], 32
    %v504 = vld [vmem:[%s503] sm:$0xff]
    %v505 = vpack.c.bf16 %v496, %v496
    %507 = vrot.lane.b32.xlu0 %v505, 32
    %v508 = vpop.permute.xlu0 %507
    %v510 = vsel %vm80, %v508, 0
    %512 = vmatprep.subr.bf16.mxu0 0
    %513 = vmatpush1.bf16.msra.mxu0 %v182
    %514 = vmatprep.subr.bf16.mxu0 0
    %515 = vmatpush1.bf16.msra.mxu0 %v183
    %516 = vmatprep.subr.bf16.mxu0 0
    %517 = vmatpush1.bf16.msra.mxu0 0
    %518 = vmatprep.subr.bf16.mxu0 0
    %519 = vmatpush1.bf16.msra.mxu0 0
    %520 = vmatprep.subr.bf16.mxu0 0
    %521 = vmatpush1.bf16.msra.mxu0 0
    %522 = vmatprep.subr.bf16.mxu0 0
    %523 = vmatpush1.bf16.msra.mxu0 0
    %524 = vmatprep.subr.bf16.mxu0 0
    %525 = vmatpush1.bf16.msra.mxu0 0
    %526 = vmatprep.subr.bf16.mxu0 0
    %527 = vmatpush1.bf16.msra.mxu0 0
    %528 = vmatprep.subr.bf16.mxu0 0
    %529 = vmatpush1.bf16.msra.mxu0 0
    %530 = vmatprep.subr.bf16.mxu0 0
    %531 = vmatpush1.bf16.msra.mxu0 0
    %532 = vmatprep.subr.bf16.mxu0 0
    %533 = vmatpush1.bf16.msra.mxu0 0
    %534 = vmatprep.subr.bf16.mxu0 0
    %535 = vmatpush1.bf16.msra.mxu0 0
    %536 = vmatprep.subr.bf16.mxu0 0
    %537 = vmatpush1.bf16.msra.mxu0 0
    %538 = vmatprep.subr.bf16.mxu0 0
    %539 = vmatpush1.bf16.msra.mxu0 0
    %540 = vmatprep.subr.bf16.mxu0 0
    %541 = vmatpush1.bf16.msra.mxu0 0
    %542 = vmatprep.subr.bf16.mxu0 0
    %543 = vmatpush1.bf16.msra.mxu0 0
    %544 = vmatprep.mubr.bf16.mxu0 0
    %545 = vmatmul.mubr.bf16.gmra.mrb[0].mxu0 %v510
    %v546 = vpop.f32.mrb[0].mxu0
    %v547 = vadd.f32 0.0, %v546
    %v548 = vpop.f32.mrb[0].mxu0
    %v549 = vpop.f32.mrb[0].mxu0
    %v550 = vpop.f32.mrb[0].mxu0
    %551 = vdwg.mxu0
    %v552 = vadd.f32 %v504, %v547
    %v553 = vxor.u32 %v552, 2147483648
    %v554 = vmul.f32 %v553, 1.442695
    %v555 = vpow.pop %v554
    %v556 = vadd.f32 %v555, 1.0
    %v557 = vrcp.pop %v556
    %v558 = vmul.f32 1.0, %v557
    %v559 = vtanh.pop %v552
    %v560 = vmul.f32 %v558, %v490
    %562 = vrot.lane.b32.xlu0 %v559, 64
    %v563 = vpop.permute.xlu0 %562
    %v565 = vmul.f32 %v558, %v563
    %567 = vrot.lane.b32.xlu0 %v565, 32
    %v568 = vpop.permute.xlu0 %567
    %v570 = vadd.f32 %v560, %v568
    %v571 = vtanh.pop %v570
    %573 = vrot.lane.b32.xlu0 %v571, 64
    %v574 = vpop.permute.xlu0 %573
    %v576 = vmul.f32 %v558, %v574
    %578 = vrot.lane.b32.xlu0 %v576, 32
    %v579 = vpop.permute.xlu0 %578
    %s581 = scalar_lea.vmem %s6, 32
    %582 = vst.msk [vmem:[%s581] sm:$0xff] %vm80, %v579
    %s583 = scalar_lea.vmem [#allocation2], 40
    %v584 = vld [vmem:[%s583] sm:$0xff]
    %v585 = vpack.c.bf16 %v576, %v576
    %587 = vrot.lane.b32.xlu0 %v585, 32
    %v588 = vpop.permute.xlu0 %587
    %v590 = vsel %vm80, %v588, 0
    %592 = vmatprep.subr.bf16.mxu0 0
    %593 = vmatpush1.bf16.msra.mxu0 %v182
    %594 = vmatprep.subr.bf16.mxu0 0
    %595 = vmatpush1.bf16.msra.mxu0 %v183
    %596 = vmatprep.subr.bf16.mxu0 0
    %597 = vmatpush1.bf16.msra.mxu0 0
    %598 = vmatprep.subr.bf16.mxu0 0
    %599 = vmatpush1.bf16.msra.mxu0 0
    %600 = vmatprep.subr.bf16.mxu0 0
    %601 = vmatpush1.bf16.msra.mxu0 0
    %602 = vmatprep.subr.bf16.mxu0 0
    %603 = vmatpush1.bf16.msra.mxu0 0
    %604 = vmatprep.subr.bf16.mxu0 0
    %605 = vmatpush1.bf16.msra.mxu0 0
    %606 = vmatprep.subr.bf16.mxu0 0
    %607 = vmatpush1.bf16.msra.mxu0 0
    %608 = vmatprep.subr.bf16.mxu0 0
    %609 = vmatpush1.bf16.msra.mxu0 0
    %610 = vmatprep.subr.bf16.mxu0 0
    %611 = vmatpush1.bf16.msra.mxu0 0
    %612 = vmatprep.subr.bf16.mxu0 0
    %613 = vmatpush1.bf16.msra.mxu0 0
    %614 = vmatprep.subr.bf16.mxu0 0
    %615 = vmatpush1.bf16.msra.mxu0 0
    %616 = vmatprep.subr.bf16.mxu0 0
    %617 = vmatpush1.bf16.msra.mxu0 0
    %618 = vmatprep.subr.bf16.mxu0 0
    %619 = vmatpush1.bf16.msra.mxu0 0
    %620 = vmatprep.subr.bf16.mxu0 0
    %621 = vmatpush1.bf16.msra.mxu0 0
    %622 = vmatprep.subr.bf16.mxu0 0
    %623 = vmatpush1.bf16.msra.mxu0 0
    %624 = vmatprep.mubr.bf16.mxu0 0
    %625 = vmatmul.mubr.bf16.gmra.mrb[0].mxu0 %v590
    %v626 = vpop.f32.mrb[0].mxu0
    %v627 = vadd.f32 0.0, %v626
    %v628 = vpop.f32.mrb[0].mxu0
    %v629 = vpop.f32.mrb[0].mxu0
    %v630 = vpop.f32.mrb[0].mxu0
    %631 = vdwg.mxu0
    %v632 = vadd.f32 %v584, %v627
    %v633 = vxor.u32 %v632, 2147483648
    %v634 = vmul.f32 %v633, 1.442695
    %v635 = vpow.pop %v634
    %v636 = vadd.f32 %v635, 1.0
    %v637 = vrcp.pop %v636
    %v638 = vmul.f32 1.0, %v637
    %v639 = vtanh.pop %v632
    %v640 = vmul.f32 %v638, %v570
    %642 = vrot.lane.b32.xlu0 %v639, 64
    %v643 = vpop.permute.xlu0 %642
    %v645 = vmul.f32 %v638, %v643
    %647 = vrot.lane.b32.xlu0 %v645, 32
    %v648 = vpop.permute.xlu0 %647
    %v650 = vadd.f32 %v640, %v648
    %v651 = vtanh.pop %v650
    %653 = vrot.lane.b32.xlu0 %v651, 64
    %v654 = vpop.permute.xlu0 %653
    %v656 = vmul.f32 %v638, %v654
    %658 = vrot.lane.b32.xlu0 %v656, 32
    %v659 = vpop.permute.xlu0 %658
    %s661 = scalar_lea.vmem %s6, 40
    %662 = vst.msk [vmem:[%s661] sm:$0xff] %vm80, %v659
    %s663 = scalar_lea.vmem [#allocation2], 48
    %v664 = vld [vmem:[%s663] sm:$0xff]
    %v665 = vpack.c.bf16 %v656, %v656
    %667 = vrot.lane.b32.xlu0 %v665, 32
    %v668 = vpop.permute.xlu0 %667
    %v670 = vsel %vm80, %v668, 0
    %672 = vmatprep.subr.bf16.mxu0 0
    %673 = vmatpush1.bf16.msra.mxu0 %v182
    %674 = vmatprep.subr.bf16.mxu0 0
    %675 = vmatpush1.bf16.msra.mxu0 %v183
    %676 = vmatprep.subr.bf16.mxu0 0
    %677 = vmatpush1.bf16.msra.mxu0 0
    %678 = vmatprep.subr.bf16.mxu0 0
    %679 = vmatpush1.bf16.msra.mxu0 0
    %680 = vmatprep.subr.bf16.mxu0 0
    %681 = vmatpush1.bf16.msra.mxu0 0
    %682 = vmatprep.subr.bf16.mxu0 0
    %683 = vmatpush1.bf16.msra.mxu0 0
    %684 = vmatprep.subr.bf16.mxu0 0
    %685 = vmatpush1.bf16.msra.mxu0 0
    %686 = vmatprep.subr.bf16.mxu0 0
    %687 = vmatpush1.bf16.msra.mxu0 0
    %688 = vmatprep.subr.bf16.mxu0 0
    %689 = vmatpush1.bf16.msra.mxu0 0
    %690 = vmatprep.subr.bf16.mxu0 0
    %691 = vmatpush1.bf16.msra.mxu0 0
    %692 = vmatprep.subr.bf16.mxu0 0
    %693 = vmatpush1.bf16.msra.mxu0 0
    %694 = vmatprep.subr.bf16.mxu0 0
    %695 = vmatpush1.bf16.msra.mxu0 0
    %696 = vmatprep.subr.bf16.mxu0 0
    %697 = vmatpush1.bf16.msra.mxu0 0
    %698 = vmatprep.subr.bf16.mxu0 0
    %699 = vmatpush1.bf16.msra.mxu0 0
    %700 = vmatprep.subr.bf16.mxu0 0
    %701 = vmatpush1.bf16.msra.mxu0 0
    %702 = vmatprep.subr.bf16.mxu0 0
    %703 = vmatpush1.bf16.msra.mxu0 0
    %704 = vmatprep.mubr.bf16.mxu0 0
    %705 = vmatmul.mubr.bf16.gmra.mrb[0].mxu0 %v670
    %v706 = vpop.f32.mrb[0].mxu0
    %v707 = vadd.f32 0.0, %v706
    %v708 = vpop.f32.mrb[0].mxu0
    %v709 = vpop.f32.mrb[0].mxu0
    %v710 = vpop.f32.mrb[0].mxu0
    %711 = vdwg.mxu0
    %v712 = vadd.f32 %v664, %v707
    %v713 = vxor.u32 %v712, 2147483648
    %v714 = vmul.f32 %v713, 1.442695
    %v715 = vpow.pop %v714
    %v716 = vadd.f32 %v715, 1.0
    %v717 = vrcp.pop %v716
    %v718 = vmul.f32 1.0, %v717
    %v719 = vtanh.pop %v712
    %v720 = vmul.f32 %v718, %v650
    %722 = vrot.lane.b32.xlu0 %v719, 64
    %v723 = vpop.permute.xlu0 %722
    %v725 = vmul.f32 %v718, %v723
    %727 = vrot.lane.b32.xlu0 %v725, 32
    %v728 = vpop.permute.xlu0 %727
    %v730 = vadd.f32 %v720, %v728
    %v731 = vtanh.pop %v730
    %733 = vrot.lane.b32.xlu0 %v731, 64
    %v734 = vpop.permute.xlu0 %733
    %v736 = vmul.f32 %v718, %v734
    %738 = vrot.lane.b32.xlu0 %v736, 32
    %v739 = vpop.permute.xlu0 %738
    %s741 = scalar_lea.vmem %s6, 48
    %742 = vst.msk [vmem:[%s741] sm:$0xff] %vm80, %v739
    %s743 = scalar_lea.vmem [#allocation2], 56
    %v744 = vld [vmem:[%s743] sm:$0xff]
    %v745 = vpack.c.bf16 %v736, %v736
    %747 = vrot.lane.b32.xlu0 %v745, 32
    %v748 = vpop.permute.xlu0 %747
    %v750 = vsel %vm80, %v748, 0
    %752 = vmatprep.subr.bf16.mxu0 0
    %753 = vmatpush1.bf16.msra.mxu0 %v182
    %754 = vmatprep.subr.bf16.mxu0 0
    %755 = vmatpush1.bf16.msra.mxu0 %v183
    %756 = vmatprep.subr.bf16.mxu0 0
    %757 = vmatpush1.bf16.msra.mxu0 0
    %758 = vmatprep.subr.bf16.mxu0 0
    %759 = vmatpush1.bf16.msra.mxu0 0
    %760 = vmatprep.subr.bf16.mxu0 0
    %761 = vmatpush1.bf16.msra.mxu0 0
    %762 = vmatprep.subr.bf16.mxu0 0
    %763 = vmatpush1.bf16.msra.mxu0 0
    %764 = vmatprep.subr.bf16.mxu0 0
    %765 = vmatpush1.bf16.msra.mxu0 0
    %766 = vmatprep.subr.bf16.mxu0 0
    %767 = vmatpush1.bf16.msra.mxu0 0
    %768 = vmatprep.subr.bf16.mxu0 0
    %769 = vmatpush1.bf16.msra.mxu0 0
    %770 = vmatprep.subr.bf16.mxu0 0
    %771 = vmatpush1.bf16.msra.mxu0 0
    %772 = vmatprep.subr.bf16.mxu0 0
    %773 = vmatpush1.bf16.msra.mxu0 0
    %774 = vmatprep.subr.bf16.mxu0 0
    %775 = vmatpush1.bf16.msra.mxu0 0
    %776 = vmatprep.subr.bf16.mxu0 0
    %777 = vmatpush1.bf16.msra.mxu0 0
    %778 = vmatprep.subr.bf16.mxu0 0
    %779 = vmatpush1.bf16.msra.mxu0 0
    %780 = vmatprep.subr.bf16.mxu0 0
    %781 = vmatpush1.bf16.msra.mxu0 0
    %782 = vmatprep.subr.bf16.mxu0 0
    %783 = vmatpush1.bf16.msra.mxu0 0
    %784 = vmatprep.mubr.bf16.mxu0 0
    %785 = vmatmul.mubr.bf16.gmra.mrb[0].mxu0 %v750
    %v786 = vpop.f32.mrb[0].mxu0
    %v787 = vadd.f32 0.0, %v786
    %v788 = vpop.f32.mrb[0].mxu0
    %v789 = vpop.f32.mrb[0].mxu0
    %v790 = vpop.f32.mrb[0].mxu0
    %791 = vdwg.mxu0
    %v792 = vadd.f32 %v744, %v787
    %v793 = vxor.u32 %v792, 2147483648
    %v794 = vmul.f32 %v793, 1.442695
    %v795 = vpow.pop %v794
    %v796 = vadd.f32 %v795, 1.0
    %v797 = vrcp.pop %v796
    %v798 = vmul.f32 1.0, %v797
    %v799 = vtanh.pop %v792
    %v800 = vmul.f32 %v798, %v730
    %802 = vrot.lane.b32.xlu0 %v799, 64
    %v803 = vpop.permute.xlu0 %802
    %v805 = vmul.f32 %v798, %v803
    %807 = vrot.lane.b32.xlu0 %v805, 32
    %v808 = vpop.permute.xlu0 %807
    %v810 = vadd.f32 %v800, %v808
    %v811 = vtanh.pop %v810
    %813 = vrot.lane.b32.xlu0 %v811, 64
    %v814 = vpop.permute.xlu0 %813
    %v816 = vmul.f32 %v798, %v814
    %818 = vrot.lane.b32.xlu0 %v816, 32
    %v819 = vpop.permute.xlu0 %818
    %s821 = scalar_lea.vmem %s6, 56
    %822 = vst.msk [vmem:[%s821] sm:$0xff] %vm80, %v819
    %823 = vst.msk [vmem:[#allocation3] sm:$0xff] %vm80, %v819
    %825 = vrot.lane.b32.xlu0 %v810, 96
    %v826 = vpop.permute.xlu0 %825
    %828 = vst.msk [vmem:[#allocation5] sm:$0xff] %vm80, %v826
    // Predicated region
    $region26: #{tpu_custom_call.1} parent=1 // pred_check
      _
    $region27: #{tpu_custom_call.1} parent=1 // pred_check_branch
      %830 = sbr.rel (0) target = $region29
    $region28: #{tpu_custom_call.1} parent=1 // pred_region
      _
    $region29: #{tpu_custom_call.1} parent=1 // pred_fallthru
      _
    // Predicated region
    $region30: #{tpu_custom_call.1} parent=1 // pred_check
      _
    $region31: #{tpu_custom_call.1} parent=1 // pred_check_branch
      %832 = sbr.rel (0) target = $region33
    $region32: #{tpu_custom_call.1} parent=1 // pred_region
      %s834 = ssub.s32 128, 128
      %835 = vsyncadd [#allocation4], %s834
      %s837 = sshll.u32 [#allocation3], 4
      %s838 = int_to_ptr.vmem [resolvable:$true] %s837
      %840 = dma.vmem_to_hbm [thread:$0]  %s838, 128, %s7, [#allocation4]
    $region33: #{tpu_custom_call.1} parent=1 // pred_fallthru
      _
    // Predicated region
    $region34: #{tpu_custom_call.1} parent=1 // pred_check
      _
    $region35: #{tpu_custom_call.1} parent=1 // pred_check_branch
      %842 = sbr.rel (0) target = $region37
    $region36: #{tpu_custom_call.1} parent=1 // pred_region
      %s844 = ssub.s32 128, 128
      %845 = vsyncadd [#allocation6], %s844
      %s847 = sshll.u32 [#allocation5], 4
      %s848 = int_to_ptr.vmem [resolvable:$true] %s847
      %850 = dma.vmem_to_hbm [thread:$0]  %s848, 128, %s8, [#allocation6]
    $region37: #{tpu_custom_call.1} parent=1 // pred_fallthru
      _
    // Predicated region
    $region38: #{tpu_custom_call.1} parent=1 // pred_check
      _
    $region39: #{tpu_custom_call.1} parent=1 // pred_check_branch
      %852 = sbr.rel (0) target = $region41
    $region40: #{tpu_custom_call.1} parent=1 // pred_region
      _
    $region41: #{tpu_custom_call.1} parent=1 // pred_fallthru
      _
    // Predicated region
    $region42: #{tpu_custom_call.1} parent=1 // pred_check
      _
    $region43: #{tpu_custom_call.1} parent=1 // pred_check_branch
      %854 = sbr.rel (0) target = $region45
    $region44: #{tpu_custom_call.1} parent=1 // pred_region
      %855 = dma.done [#allocation4], 128
    $region45: #{tpu_custom_call.1} parent=1 // pred_fallthru
      _
    // Predicated region
    $region46: #{tpu_custom_call.1} parent=1 // pred_check
      _
    $region47: #{tpu_custom_call.1} parent=1 // pred_check_branch
      %857 = sbr.rel (0) target = $region49
    $region48: #{tpu_custom_call.1} parent=1 // pred_region
      %858 = dma.done [#allocation6], 128
    $region49: #{tpu_custom_call.1} parent=1 // pred_fallthru
      _
    %859 = vsyncpa [#allocation4], 1
    %860 = vsyncpa [#allocation6], 1

</llo_original>
